<compile_context>
chip_gen: v7x
topology: tpu7x:2x2x1
jax: 0.10.0
libtpu: 0.0.40
codegen_flags: <defaults>
</compile_context>

<pallas_src>
import functools

import jax
import jax.numpy as jnp
from jax.experimental import pallas as pl
from jax.experimental.pallas import tpu as pltpu


# ----------------------------------------------------------------------------
# One-time on-device check of pltpu.roll's shift-sign convention vs jnp.roll.
# ----------------------------------------------------------------------------
@functools.lru_cache(maxsize=None)
def _pltpu_roll_matches_jnp_roll():
    def k(x_ref, o_ref):
        o_ref[...] = pltpu.roll(x_ref[...], shift=1, axis=1)

    x = jnp.broadcast_to(jnp.arange(128, dtype=jnp.float32), (8, 128))
    out = pl.pallas_call(
        k, out_shape=jax.ShapeDtypeStruct((8, 128), jnp.float32))(x)
    return bool(jnp.array_equal(out, jnp.roll(x, 1, axis=1)))


# ----------------------------------------------------------------------------
# Fused per-step kernel: pool + attention + expert aggregation + conv matmul
# for `samples_per_step` samples (ping-pong slab buffers => VPU/MXU overlap).
# ----------------------------------------------------------------------------
def _condconv_fused_kernel(x_ref, mask_ref, attw_ref, wbank_ref, biast_ref,
                           o_ref, *patches_refs,
                           HW, W, KH, KW, Cin_pad, K, padding,
                           samples_per_step, roll_is_jnp_roll):
    # x_ref       : (spb, Cin_pad, HW)        f32 flattened NCHW activations
    # mask_ref    : (KH*KW, 1, HW)            f32 precomputed boundary masks
    # attw_ref    : (Cin_pad, K)              f32 attention 1x1-conv weight^T
    # wbank_ref   : (K, Cout, KH*KW*Cin_pad)  bf16 expert weight bank, (kh,kw,c)-minor
    # biast_ref   : (Cout, K)                 f32 expert bias bank^T
    # o_ref       : (spb, Cout, HW)           f32 output (NCHW, spatial flattened)
    # patches_refs: tuple of (KH*KW*Cin_pad, HW) bf16 im2col slab scratch buffers
    inv_hw = 1.0 / HW
    n_bufs = len(patches_refs)

    for s in range(samples_per_step):
        xb = x_ref[s]                                                # (Cin_pad, HW) f32

        # --- attention: global avg pool -> 1x1 conv -> sigmoid (VPU/XLU/EUP) ---
        pooled = jnp.sum(xb, axis=1, keepdims=True) * inv_hw        # (Cin_pad, 1)
        logits = jnp.sum(attw_ref[...] * pooled, axis=0, keepdims=True)  # (1, K)
        att = jax.nn.sigmoid(logits)                                 # (1, K) f32

        # --- aggregate expert weights/bias; init from expert 0, f32 accumulate ---
        agg_w = att[:, 0:1] * wbank_ref[0]                           # (Cout, KKC) f32
        agg_b = att[:, 0:1] * biast_ref[:, 0:1]                      # (Cout, 1)  f32
        for k in range(1, K):
            a_k = att[:, k:k + 1]
            agg_w = agg_w + a_k * wbank_ref[k]
            agg_b = agg_b + a_k * biast_ref[:, k:k + 1]
        agg_w = agg_w.astype(jnp.bfloat16)                           # bf16 MXU operand

        # --- im2col slab: XLU rolls + precomputed masks, aligned bf16 stores ----
        slab = patches_refs[s % n_bufs]
        for kh in range(KH):
            for kw in range(KW):
                d = (kh - padding) * W + (kw - padding)              # static shift
                shift = (-d) % HW if roll_is_jnp_roll else d % HW
                rolled = xb if shift == 0 else pltpu.roll(xb, shift=shift, axis=1)
                tap = kh * KW + kw
                patch = rolled * mask_ref[tap]                       # (Cin_pad, HW) f32
                slab[tap * Cin_pad:(tap + 1) * Cin_pad, :] = patch.astype(jnp.bfloat16)

        # --- one bf16 MXU matmul per sample, f32 accumulate, lane-dense output ---
        out = jnp.dot(agg_w, slab[...],
                      preferred_element_type=jnp.float32) + agg_b    # (Cout, HW) f32
        o_ref[s] = out.astype(o_ref.dtype)


# ----------------------------------------------------------------------------
# Wrapper (NCHW in / NCHW out, like the PyTorch module).
# ----------------------------------------------------------------------------
def cond_conv_forward(x_nchw, att_weight, weight, bias, *,
                      kernel_size, stride=1, padding=0, dilation=1, groups=1):
    assert stride == 1 and groups == 1 and dilation == 1, \
        "TODO(synk): only stride=1, groups=1, dilation=1 implemented"
    bs, Cin, H, W = x_nchw.shape
    K, Cout, Cin_w, KH, KW = weight.shape
    assert Cin_w == Cin and KH == kernel_size and KW == kernel_size

    Hout = (H + 2 * padding - KH) // stride + 1
    Wout = (W + 2 * padding - KW) // stride + 1
    assert Hout == H and Wout == W, \
        "TODO(synk): kernel implements 'same' convolutions (kernel_size == 2*padding + 1)"

    HW = H * W
    T = KH * KW
    # Pad Cin to a sublane multiple (16 => aligned bf16 per-tap slab stores, and a
    # multiple of 8 for the f32 activation rolls).
    SUB = 16
    Cin_pad = ((Cin + SUB - 1) // SUB) * SUB
    KKC = T * Cin_pad

    # Two samples per grid step (ping-pong slabs) to overlap VPU/XLU with MXU and
    # amortize per-step grid overhead.
    spb = 2 if bs % 2 == 0 and bs >= 2 else 1
    n_bufs = min(spb, 2)

    # --- one-time wrapper-side prep (free reshapes / tiny pads, outside hot loop) ---
    xf = x_nchw.astype(jnp.float32).reshape(bs, Cin, HW)
    x2 = jnp.pad(xf, ((0, 0), (0, Cin_pad - Cin), (0, 0)))           # (bs, Cin_pad, HW)

    attw = att_weight.astype(jnp.float32).reshape(K, Cin)
    attw_t = jnp.pad(attw, ((0, 0), (0, Cin_pad - Cin))).T           # (Cin_pad, K)

    # (K, Cout, Cin, KH, KW) -> pad Cin -> (K, Cout, KH, KW, Cin_pad) -> (K, Cout, KKC)
    # so columns are (kh, kw, c)-minor, matching the im2col row order. Stored bf16.
    wpad = jnp.pad(weight.astype(jnp.float32),
                   ((0, 0), (0, 0), (0, Cin_pad - Cin), (0, 0), (0, 0)))
    wbank = jnp.transpose(wpad, (0, 1, 3, 4, 2)).reshape(K, Cout, KKC)
    wbank = wbank.astype(jnp.bfloat16)

    bias_t = jnp.transpose(bias.astype(jnp.float32), (1, 0))         # (Cout, K)

    # Precompute the KH*KW boundary masks once (depend only on H, W, padding).
    q = jnp.arange(HW, dtype=jnp.int32)
    row, col = q // W, q % W
    mask_list = []
    for kh in range(KH):
        for kw in range(KW):
            dh, dw = kh - padding, kw - padding
            mask_list.append((row + dh >= 0) & (row + dh < H) &
                             (col + dw >= 0) & (col + dw < W))
    masks = jnp.stack(mask_list).astype(jnp.float32).reshape(T, 1, HW)

    # Explicit VMEM budget per generation (don't rely on 16/32 MiB scoped defaults).
    MiB = 1024 * 1024
    try:
        vmem_cap = int(pltpu.get_tpu_info().vmem_capacity_bytes)
    except Exception:
        vmem_cap = 64 * MiB
    vmem_limit = int(max(min(vmem_cap - 8 * MiB, 100 * MiB), 16 * MiB))

    kernel = functools.partial(
        _condconv_fused_kernel,
        HW=HW, W=W, KH=KH, KW=KW, Cin_pad=Cin_pad, K=K, padding=padding,
        samples_per_step=spb, roll_is_jnp_roll=_pltpu_roll_matches_jnp_roll())

    out_flat = pl.pallas_call(
        kernel,
        out_shape=jax.ShapeDtypeStruct((bs, Cout, HW), jnp.float32),
        grid=(bs // spb,),
        in_specs=[
            pl.BlockSpec((spb, Cin_pad, HW), lambda b: (b, 0, 0)),
            pl.BlockSpec((T, 1, HW), lambda b: (0, 0, 0)),       # resident masks
            pl.BlockSpec((Cin_pad, K), lambda b: (0, 0)),        # resident attn W^T
            pl.BlockSpec((K, Cout, KKC), lambda b: (0, 0, 0)),   # resident bf16 bank
            pl.BlockSpec((Cout, K), lambda b: (0, 0)),           # resident bias^T
        ],
        out_specs=pl.BlockSpec((spb, Cout, HW), lambda b: (b, 0, 0)),
        scratch_shapes=[pltpu.VMEM((KKC, HW), jnp.bfloat16)] * n_bufs,
        compiler_params=pltpu.CompilerParams(
            dimension_semantics=("parallel",),
            vmem_limit_bytes=vmem_limit),
    )(x2, masks, attw_t, wbank, bias_t)

    return out_flat.reshape(bs, Cout, Hout, Wout)                    # NCHW, free reshape


# ----------------------------------------------------------------------------
# Pure-JAX f32 reference (for validation only).
# ----------------------------------------------------------------------------
def _ref_forward(x_nchw, att_weight, weight, bias, *, stride, padding):
    bs, Cin, H, W = x_nchw.shape
    K, Cout, _, KH, KW = weight.shape
    pooled = x_nchw.mean(axis=(2, 3))                                # (bs, Cin)
    att = jax.nn.sigmoid(pooled @ att_weight.reshape(K, Cin).T)      # (bs, K)
    agg_w = (att @ weight.reshape(K, -1)).reshape(bs, Cout, Cin, KH, KW)
    agg_b = att @ bias                                               # (bs, Cout)

    def one(xb, wb, bb):
        y = jax.lax.conv_general_dilated(
            xb[None], wb, (stride, stride),
            [(padding, padding), (padding, padding)],
            dimension_numbers=('NCHW', 'OIHW', 'NCHW'))
        return y[0] + bb[:, None, None]

    return jax.vmap(one)(x_nchw, agg_w, agg_b)


if __name__ == "__main__":
    # Small config consistent with the module.
    bs, in_planes, out_planes = 2, 4, 8
    H = W = 16
    K = 4
    kernel_size, stride, padding = 3, 1, 1

    key = jax.random.PRNGKey(0)
    kx, ka, kw, kb = jax.random.split(key, 4)

    x = jax.random.normal(kx, (bs, in_planes, H, W), jnp.float32)

    # Attention 1x1 conv weight: kaiming_normal_ (fan_out = K*1*1)
    att_weight = jax.random.normal(ka, (K, in_planes, 1, 1), jnp.float32) * (2.0 / K) ** 0.5
    # CondConv weight bank: kaiming_uniform_ per expert, fan_in = Cin*k*k
    bound = (6.0 / (in_planes * kernel_size * kernel_size)) ** 0.5
    weight = jax.random.uniform(
        kw, (K, out_planes, in_planes, kernel_size, kernel_size),
        jnp.float32, minval=-bound, maxval=bound)
    # bias: plain randn (the module never re-initializes it)
    bias = jax.random.normal(kb, (K, out_planes), jnp.float32)

    out = cond_conv_forward(x, att_weight, weight, bias,
                            kernel_size=kernel_size, stride=stride,
                            padding=padding)
    out = jax.block_until_ready(out)

    ref = _ref_forward(x, att_weight, weight, bias,
                       stride=stride, padding=padding)
    ref = jax.block_until_ready(ref)

    assert out.shape == (bs, out_planes, H // stride, W // stride), out.shape
    # Tolerance loosened vs the f32 reference because the conv matmul now uses
    # bf16 operands (f32 accumulate); well within bf16 rounding bounds here.
    assert jnp.allclose(out, ref, rtol=2e-2, atol=5e-2), \
        float(jnp.max(jnp.abs(out - ref)))

    print("KERNEL_OK")
</pallas_src>

<mosaic_0001>
module attributes {stable_mosaic.version = 11 : i64} {
  func.func @k(%arg0: memref<8x128xf32, #tpu.memory_space<vmem>>, %arg1: memref<8x128xf32, #tpu.memory_space<vmem>>) attributes {dimension_semantics = [], scalar_prefetch = 0 : i64, scratch_operands = 0 : i64, tpu.core_type = #tpu.core_type<tc>} {
    %c0 = arith.constant 0 : index
    %c0_0 = arith.constant 0 : index
    %0 = vector.load %arg0[%c0, %c0_0] : memref<8x128xf32, #tpu.memory_space<vmem>>, vector<8x128xf32>
    %c1_i32 = arith.constant 1 : i32
    %1 = tpu.dynamic_rotate %0 by %c1_i32 dim 1 : vector<8x128xf32>, i32 -> vector<8x128xf32>
    %c0_1 = arith.constant 0 : index
    %c0_2 = arith.constant 0 : index
    %2 = vector.load %arg1[%c0_1, %c0_2] : memref<8x128xf32, #tpu.memory_space<vmem>>, vector<8x128xf32>
    tpu.vector_store %arg1[%c0_1, %c0_2], %1 {strides = array<i32>} : memref<8x128xf32, #tpu.memory_space<vmem>>, vector<8x128xf32>,
    return
  }
}

</mosaic_0001>

<llo_original>
// kernel: tpu_custom_call.1
$region0: #{tpu_custom_call.1}
  #allocation0 [shape = 'u32[]', space=smem, size = 0x4, offset = 0x4, fixed_abs, tag = 'smem constant byte address 0x4 - core index']
  #allocation1 [shape = 'u32[144,128]{1,0:T(1,128)}', space=vmem, size = 0x12000, scoped, tag = 'internal scratch']
  %s0 = inlined_call_operand.hbm [shape: f32[8,128], index: 0, kind: input, shape index: {}]
  %s1 = inlined_call_operand.hbm [shape: f32[8,128], index: 1, kind: output, shape index: {}]
  %s2 = sld [smem:[#allocation0]]
  $region18: #{tpu_custom_call.1} parent=0
    _
  %s4 = ssub.s32 1, %s2
  %s5 = scalar_select 0, %s4, %s2
  $region1: #{tpu_custom_call.1} parent=0
    #allocation2 [shape = 'u8[4096]{0}', space=vmem, size = 0x1000, scoped, tag = 'input window, operand 0, single buffered']
    #allocation3 [shape = 's32[1]{0}', space=sflag, size = 0x4, scoped, tag = 'scoped memory for tpu_custom_call.1']
    #allocation4 [shape = 's32[1]{0}', space=sflag, size = 0x4, scoped, tag = 'scoped memory for tpu_custom_call.1']
    #allocation5 [shape = 'u8[4096]{0}', space=vmem, size = 0x1000, scoped, tag = 'output window, operand 0, single buffered']
    %6 = vsyncpa [#allocation3], 0
    %7 = vsyncpa [#allocation4], 0
    // Predicated region
    $region2: #{tpu_custom_call.1} parent=1 // pred_check
      _
    $region3: #{tpu_custom_call.1} parent=1 // pred_check_branch
      %9 = sbr.rel (0) target = $region5
    $region4: #{tpu_custom_call.1} parent=1 // pred_region
      %s11 = ssub.s32 128, 128
      %12 = vsyncadd [#allocation3], %s11
      %s14 = sshll.u32 [#allocation2], 4
      %s15 = int_to_ptr.vmem [resolvable:$true] %s14
      %17 = dma.hbm_to_vmem [thread:$0]  %s0, 128, %s15, [#allocation3]
    $region5: #{tpu_custom_call.1} parent=1 // pred_fallthru
      _
    // Predicated region
    $region6: #{tpu_custom_call.1} parent=1 // pred_check
      _
    $region7: #{tpu_custom_call.1} parent=1 // pred_check_branch
      %19 = sbr.rel (0) target = $region9
    $region8: #{tpu_custom_call.1} parent=1 // pred_region
      %20 = dma.done [#allocation3], 128
    $region9: #{tpu_custom_call.1} parent=1 // pred_fallthru
      _
    %v21 = vld [vmem:[#allocation2] sm:$0xff]
    %22 = vrot.lane.b32.xlu0 %v21, 1
    %v23 = vpop.permute.xlu0 %22
    %24 = vst [vmem:[#allocation5] sm:$0xff] %v23
    // Predicated region
    $region10: #{tpu_custom_call.1} parent=1 // pred_check
      _
    $region11: #{tpu_custom_call.1} parent=1 // pred_check_branch
      %26 = sbr.rel (0) target = $region13
    $region12: #{tpu_custom_call.1} parent=1 // pred_region
      %s28 = ssub.s32 128, 128
      %29 = vsyncadd [#allocation4], %s28
      %s31 = sshll.u32 [#allocation5], 4
      %s32 = int_to_ptr.vmem [resolvable:$true] %s31
      %34 = dma.vmem_to_hbm [thread:$0]  %s32, 128, %s1, [#allocation4]
    $region13: #{tpu_custom_call.1} parent=1 // pred_fallthru
      _
    // Predicated region
    $region14: #{tpu_custom_call.1} parent=1 // pred_check
      _
    $region15: #{tpu_custom_call.1} parent=1 // pred_check_branch
      %36 = sbr.rel (0) target = $region17
    $region16: #{tpu_custom_call.1} parent=1 // pred_region
      %37 = dma.done [#allocation4], 128
    $region17: #{tpu_custom_call.1} parent=1 // pred_fallthru
      _
    %38 = vsyncpa [#allocation3], 1
    %39 = vsyncpa [#allocation4], 1

</llo_original>
